<compile_context>
chip_gen: v7x
topology: tpu7x:2x2x1
jax: 0.10.0
libtpu: 0.0.40
codegen_flags: <defaults>
</compile_context>

<pallas_src>
import functools

import jax
import jax.numpy as jnp
import numpy as np
from jax.experimental import pallas as pl
from jax.experimental.pallas import tpu as pltpu


def attention_kernel(enc_ref, hid_ref, v_enc_ref, v_hid_ref, b_ref, ctx_ref):
    # enc_ref: (TB, S, H) block, hid_ref: (TB, H), v_*: (1, H), b_ref: (1, 1)
    enc = enc_ref[...].astype(jnp.float32)        # (TB, S, H)
    hid = hid_ref[...].astype(jnp.float32)        # (TB, H)
    v_enc = v_enc_ref[...].astype(jnp.float32)    # (1, H)
    v_hid = v_hid_ref[...].astype(jnp.float32)    # (1, H)

    # Folded linear chain:
    #   score[b, s] = <enc[b,s,:], v_enc> + <hid[b,:], v_hid> + b_fold
    # Lane-reduce over H on VPU+XLU (no N=1 MXU matmul, no concat).
    enc_scores = jnp.sum(enc * v_enc[None, :, :], axis=-1)        # (TB, S)
    hid_scores = jnp.sum(hid * v_hid, axis=-1, keepdims=True)     # (TB, 1)
    scores = enc_scores + hid_scores + b_ref[...]                 # (TB, S)

    # Softmax over the sequence dim (last axis -> lane-oriented reductions).
    m = jnp.max(scores, axis=-1, keepdims=True)                   # (TB, 1)
    e = jnp.exp(scores - m)                                       # (TB, S)
    denom = jnp.sum(e, axis=-1, keepdims=True)                    # (TB, 1)
    inv = pl.reciprocal(denom, approx=True)     # EUP slot (otherwise idle)
    inv = inv * (2.0 - denom * inv)             # one Newton step -> f32 accuracy
    w = e * inv                                                   # (TB, S)

    # context[b, h] = sum_s w[b, s] * enc[b, s, h]
    ctx = jnp.sum(w[:, :, None] * enc, axis=1)                    # (TB, H)
    ctx_ref[...] = ctx.astype(ctx_ref.dtype)


def fold_params(params):
    """Collapse match1..match4 + to_weight (all linear) into two H-vectors
    and a scalar bias so that  scores = enc@v_enc + hid@v_hid + b_fold."""
    w1, b1, w2, b2, w3, b3, w4, b4, wt = params
    H = w2.shape[0]
    v = w4 @ wt            # (H, 1)   — right-to-left: matrix-vector chain only
    v = w3 @ v
    v = w2 @ v
    v_full = w1 @ v        # (2H, 1)
    v_enc = v_full[:H].reshape(1, H)
    v_hid = v_full[H:].reshape(1, H)
    b = b1 @ w2 + b2
    b = b @ w3 + b3
    b = b @ w4 + b4
    b_fold = b @ wt        # (1, 1)
    return (v_enc.astype(jnp.float32),
            v_hid.astype(jnp.float32),
            b_fold.astype(jnp.float32))


def _choose_tile_b(B, S, target_rows):
    # Aim for ~target_rows (= B*S) rows per grid step: amortizes the ~0.35us
    # per-step pipeline overhead and keeps output stores sublane-dense.
    # (128 rows already suffices on v5e; 256 suits v6e/v7x.)
    tb = max(1, target_rows // max(S, 1))
    if tb >= B:
        return B                       # single block covers the batch dim
    return max(8, (tb // 8) * 8)       # keep sublane-friendly block sizes


@functools.partial(jax.jit, static_argnames=("target_rows",))
def attention_forward(hidden_state, encoder_outputs, params, *, target_rows=256):
    """hidden_state: (B, H); encoder_outputs: (B, S, H) -> context (B, H)."""
    B, S, H = encoder_outputs.shape
    v_enc, v_hid, b_fold = fold_params(params)

    tile_b = _choose_tile_b(B, S, target_rows)
    pad_b = (-B) % tile_b
    if pad_b:  # zero-pad the batch so blocks tile evenly; padded rows sliced off
        encoder_outputs = jnp.pad(encoder_outputs, ((0, pad_b), (0, 0), (0, 0)))
        hidden_state = jnp.pad(hidden_state, ((0, pad_b), (0, 0)))
    Bp = B + pad_b
    grid = (Bp // tile_b,)
    # NOTE: on v7x, realistic batch sizes give >= 2 "parallel" grid steps so
    # both TensorCores get work; the tiny demo (grid=1) is fine either way.

    out = pl.pallas_call(
        attention_kernel,
        out_shape=jax.ShapeDtypeStruct((Bp, H), encoder_outputs.dtype),
        grid=grid,
        in_specs=[
            pl.BlockSpec((tile_b, S, H), lambda i: (i, 0, 0)),  # encoder_outputs
            pl.BlockSpec((tile_b, H), lambda i: (i, 0)),        # hidden_state
            pl.BlockSpec((1, H), lambda i: (0, 0)),             # folded v_enc
            pl.BlockSpec((1, H), lambda i: (0, 0)),             # folded v_hid
            pl.BlockSpec((1, 1), lambda i: (0, 0)),             # folded bias
        ],
        out_specs=pl.BlockSpec((tile_b, H), lambda i: (i, 0)),
        compiler_params=pltpu.CompilerParams(
            dimension_semantics=("parallel",),
            # Working set per step is tiny after the fold (~2 * tile_b*S*H f32
            # + a few H-vectors); 32 MiB leaves ample headroom on v5e/v6e/v7x.
            vmem_limit_bytes=32 * 1024 * 1024,
        ),
    )(encoder_outputs, hidden_state, v_enc, v_hid, b_fold)
    return out[:B]


def init_params(key, hidden_size):
    """Deterministic init mimicking PyTorch Linear default (uniform +-1/sqrt(fan_in)).
    Weights are stored as (in_features, out_features) so y = x @ W + b."""
    H = hidden_size
    ks = jax.random.split(key, 9)

    def lin(k, fan_in, fan_out, bias=True):
        bound = 1.0 / np.sqrt(fan_in)
        kw, kb = jax.random.split(k)
        w = jax.random.uniform(kw, (fan_in, fan_out), jnp.float32, -bound, bound)
        if not bias:
            return w
        b = jax.random.uniform(kb, (1, fan_out), jnp.float32, -bound, bound)
        return w, b

    w1, b1 = lin(ks[0], 2 * H, H)
    w2, b2 = lin(ks[1], H, H)
    w3, b3 = lin(ks[2], H, H)
    w4, b4 = lin(ks[3], H, H)
    wt = lin(ks[4], H, 1, bias=False)
    return (w1, b1, w2, b2, w3, b3, w4, b4, wt)


def attention_reference(hidden_state, encoder_outputs, params):
    """Pure-JAX unfolded reference matching the PyTorch forward exactly."""
    w1, b1, w2, b2, w3, b3, w4, b4, wt = params
    B, S, H = encoder_outputs.shape
    hid = jnp.broadcast_to(hidden_state[:, None, :], (B, S, H))
    x = jnp.concatenate([encoder_outputs, hid], axis=2).reshape(-1, 2 * H)
    x = x @ w1 + b1
    x = x @ w2 + b2
    x = x @ w3 + b3
    x = x @ w4 + b4
    att = (x @ wt).reshape(B, S)
    att = jax.nn.softmax(att, axis=1)
    ctx = jnp.einsum("bs,bsh->bh", att, encoder_outputs)
    return ctx


if __name__ == "__main__":
    B, S, H = 2, 8, 32
    key = jax.random.PRNGKey(0)
    k_params, k_enc, k_hid = jax.random.split(key, 3)

    params = init_params(k_params, H)
    encoder_outputs = jax.random.normal(k_enc, (B, S, H), jnp.float32)
    hidden_state = jax.random.normal(k_hid, (B, H), jnp.float32)

    ctx = attention_forward(hidden_state, encoder_outputs, params)
    ctx = jax.block_until_ready(ctx)

    ref = attention_reference(hidden_state, encoder_outputs, params)
    # Folding the linear chain reassociates float ops (~1e-6 level), hence the
    # slightly relaxed tolerance vs. the unfolded reference.
    np.testing.assert_allclose(np.asarray(ctx), np.asarray(ref),
                               rtol=1e-4, atol=1e-4)
    print("KERNEL_OK")
</pallas_src>

<mosaic_0001>
module attributes {stable_mosaic.version = 11 : i64} {
  func.func @attention_kernel(%arg0: i32, %arg1: memref<2x8x32xf32, #tpu.memory_space<vmem>>, %arg2: memref<2x32xf32, #tpu.memory_space<vmem>>, %arg3: memref<1x32xf32, #tpu.memory_space<vmem>>, %arg4: memref<1x32xf32, #tpu.memory_space<vmem>>, %arg5: memref<1x1xf32, #tpu.memory_space<vmem>>, %arg6: memref<2x32xf32, #tpu.memory_space<vmem>>) attributes {dimension_semantics = [#tpu.dimension_semantics<parallel>], iteration_bounds = array<i64: 1>, scalar_prefetch = 0 : i64, scratch_operands = 0 : i64, tpu.core_type = #tpu.core_type<tc>, window_params = [{transform_indices = @transform_0, window_bounds = array<i64: 2, 8, 32>}, {transform_indices = @transform_1, window_bounds = array<i64: 2, 32>}, {pipeline_mode = #tpu.pipeline_mode<synchronous>, transform_indices = @transform_2, window_bounds = array<i64: 1, 32>}, {pipeline_mode = #tpu.pipeline_mode<synchronous>, transform_indices = @transform_3, window_bounds = array<i64: 1, 32>}, {pipeline_mode = #tpu.pipeline_mode<synchronous>, transform_indices = @transform_4, window_bounds = array<i64: 1, 1>}, {transform_indices = @transform_5, window_bounds = array<i64: 2, 32>}]} {
    %c0 = arith.constant 0 : index
    %c0_0 = arith.constant 0 : index
    %c0_1 = arith.constant 0 : index
    %0 = vector.load %arg1[%c0, %c0_0, %c0_1] : memref<2x8x32xf32, #tpu.memory_space<vmem>>, vector<2x8x32xf32>
    %c0_2 = arith.constant 0 : index
    %c0_3 = arith.constant 0 : index
    %1 = vector.load %arg2[%c0_2, %c0_3] : memref<2x32xf32, #tpu.memory_space<vmem>>, vector<2x32xf32>
    %c0_4 = arith.constant 0 : index
    %c0_5 = arith.constant 0 : index
    %2 = vector.load %arg3[%c0_4, %c0_5] : memref<1x32xf32, #tpu.memory_space<vmem>>, vector<1x32xf32>
    %c0_6 = arith.constant 0 : index
    %c0_7 = arith.constant 0 : index
    %3 = vector.load %arg4[%c0_6, %c0_7] : memref<1x32xf32, #tpu.memory_space<vmem>>, vector<1x32xf32>
    %4 = vector.shape_cast %2 : vector<1x32xf32> to vector<1x1x32xf32>
    %5 = vector.broadcast %4 : vector<1x1x32xf32> to vector<2x8x32xf32>
    %6 = arith.mulf %0, %5 : vector<2x8x32xf32>
    %cst = arith.constant dense<0.000000e+00> : vector<2x8xf32>
    %7 = vector.multi_reduction <add>, %6, %cst [2] : vector<2x8x32xf32> to vector<2x8xf32>
    %8 = vector.broadcast %3 : vector<1x32xf32> to vector<2x32xf32>
    %9 = arith.mulf %1, %8 : vector<2x32xf32>
    %cst_8 = arith.constant dense<0.000000e+00> : vector<2xf32>
    %10 = vector.multi_reduction <add>, %9, %cst_8 [1] : vector<2x32xf32> to vector<2xf32>
    %11 = vector.shape_cast %10 : vector<2xf32> to vector<2x1xf32>
    %12 = vector.broadcast %11 : vector<2x1xf32> to vector<2x8xf32>
    %13 = arith.addf %7, %12 : vector<2x8xf32>
    %c0_9 = arith.constant 0 : index
    %c0_10 = arith.constant 0 : index
    %14 = vector.load %arg5[%c0_9, %c0_10] : memref<1x1xf32, #tpu.memory_space<vmem>>, vector<1x1xf32>
    %15 = vector.broadcast %14 : vector<1x1xf32> to vector<2x8xf32>
    %16 = arith.addf %13, %15 : vector<2x8xf32>
    %cst_11 = arith.constant dense<0xFF800000> : vector<2xf32>
    %17 = vector.multi_reduction <maximumf>, %16, %cst_11 [1] : vector<2x8xf32> to vector<2xf32>
    %18 = vector.shape_cast %17 : vector<2xf32> to vector<2x1xf32>
    %19 = vector.broadcast %18 : vector<2x1xf32> to vector<2x8xf32>
    %20 = arith.subf %16, %19 : vector<2x8xf32>
    %21 = math.exp %20 : vector<2x8xf32>
    %cst_12 = arith.constant dense<0.000000e+00> : vector<2xf32>
    %22 = vector.multi_reduction <add>, %21, %cst_12 [1] : vector<2x8xf32> to vector<2xf32>
    %23 = vector.shape_cast %22 : vector<2xf32> to vector<2x1xf32>
    %24 = tpu.reciprocal %23 {approx = true} : vector<2x1xf32> -> vector<2x1xf32>
    %25 = arith.mulf %23, %24 : vector<2x1xf32>
    %cst_13 = arith.constant 2.000000e+00 : f32
    %26 = vector.broadcast %cst_13 : f32 to vector<2x1xf32>
    %27 = arith.subf %26, %25 : vector<2x1xf32>
    %28 = arith.mulf %24, %27 : vector<2x1xf32>
    %29 = vector.broadcast %28 : vector<2x1xf32> to vector<2x8xf32>
    %30 = arith.mulf %21, %29 : vector<2x8xf32>
    %31 = vector.shape_cast %30 : vector<2x8xf32> to vector<2x8x1xf32>
    %32 = vector.broadcast %31 : vector<2x8x1xf32> to vector<2x8x32xf32>
    %33 = arith.mulf %32, %0 : vector<2x8x32xf32>
    %cst_14 = arith.constant dense<0.000000e+00> : vector<2x32xf32>
    %34 = vector.multi_reduction <add>, %33, %cst_14 [1] : vector<2x8x32xf32> to vector<2x32xf32>
    %c0_15 = arith.constant 0 : index
    %c0_16 = arith.constant 0 : index
    %35 = vector.load %arg6[%c0_15, %c0_16] : memref<2x32xf32, #tpu.memory_space<vmem>>, vector<2x32xf32>
    tpu.vector_store %arg6[%c0_15, %c0_16], %34 {strides = array<i32>} : memref<2x32xf32, #tpu.memory_space<vmem>>, vector<2x32xf32>,
    return
  }
  func.func @transform_0(%arg0: i32) -> (i32, i32, i32) {
    %c0_i32 = arith.constant 0 : i32
    %c0_i32_0 = arith.constant 0 : i32
    %c0_i32_1 = arith.constant 0 : i32
    return %arg0, %c0_i32, %c0_i32_0 : i32, i32, i32
  }
  func.func @transform_1(%arg0: i32) -> (i32, i32) {
    %c0_i32 = arith.constant 0 : i32
    %c0_i32_0 = arith.constant 0 : i32
    return %arg0, %c0_i32 : i32, i32
  }
  func.func @transform_2(%arg0: i32) -> (i32, i32) {
    %c0_i32 = arith.constant 0 : i32
    %c0_i32_0 = arith.constant 0 : i32
    %c0_i32_1 = arith.constant 0 : i32
    return %c0_i32, %c0_i32_0 : i32, i32
  }
  func.func @transform_3(%arg0: i32) -> (i32, i32) {
    %c0_i32 = arith.constant 0 : i32
    %c0_i32_0 = arith.constant 0 : i32
    %c0_i32_1 = arith.constant 0 : i32
    return %c0_i32, %c0_i32_0 : i32, i32
  }
  func.func @transform_4(%arg0: i32) -> (i32, i32) {
    %c0_i32 = arith.constant 0 : i32
    %c0_i32_0 = arith.constant 0 : i32
    %c0_i32_1 = arith.constant 0 : i32
    return %c0_i32, %c0_i32_0 : i32, i32
  }
  func.func @transform_5(%arg0: i32) -> (i32, i32) {
    %c0_i32 = arith.constant 0 : i32
    %c0_i32_0 = arith.constant 0 : i32
    return %arg0, %c0_i32 : i32, i32
  }
}

</mosaic_0001>

<llo_original>
// kernel: attention_forward.1
$region0: #{attention_forward.1}
  #allocation0 [shape = 'u32[]', space=smem, size = 0x4, offset = 0x4, fixed_abs, tag = 'smem constant byte address 0x4 - core index']
  #allocation1 [shape = 'u32[144,128]{1,0:T(1,128)}', space=vmem, size = 0x12000, scoped, tag = 'internal scratch']
  #allocation2 [shape = 'f32[1,1]{1,0:T(1,128)S(1)}', space=vmem, size = 0x200, scoped, tag = 'scoped memory for attention_forward.1']
  %s0 = inlined_call_operand.vmem [shape: f32[2,8,32], index: 0, kind: input, shape index: {}]
  %s1 = inlined_call_operand.vmem [shape: f32[2,32], index: 1, kind: input, shape index: {}]
  %s2 = inlined_call_operand.vmem [shape: f32[1,32], index: 2, kind: input, shape index: {}]
  %s3 = inlined_call_operand.vmem [shape: f32[1,32], index: 3, kind: input, shape index: {}]
  %s4 = inlined_call_operand.<no memory space> [shape: f32[1,1], index: 4, kind: input, shape index: {}]
  %s5 = inlined_call_operand.hbm [shape: f32[2,32], index: 5, kind: output, shape index: {}]
  %s6 = sld [smem:[#allocation0]]
  $region30: #{attention_forward.1} parent=0
    _
  %s8 = ssub.s32 1, %s6
  %s9 = scalar_select 0, %s8, %s6
  %v10 = vstv %s4
  %11 = vst [vmem:[#allocation2] sm:$0x1] %v10
  $region1: #{attention_forward.1} parent=0
    #allocation3 [shape = 'u8[1024]{0}', space=vmem, size = 0x400, scoped, tag = 'output window, operand 0, single buffered']
    #allocation4 [shape = 's32[1]{0}', space=sflag, size = 0x4, scoped, tag = 'scoped memory for attention_forward.1']
    %12 = vsyncpa [#allocation4], 0
    // Predicated region
    $region2: #{attention_forward.1} parent=1 // pred_check
      _
    $region3: #{attention_forward.1} parent=1 // pred_check_branch
      %14 = sbr.rel (0) target = $region5
    $region4: #{attention_forward.1} parent=1 // pred_region
      _
    $region5: #{attention_forward.1} parent=1 // pred_fallthru
      _
    // Predicated region
    $region6: #{attention_forward.1} parent=1 // pred_check
      _
    $region7: #{attention_forward.1} parent=1 // pred_check_branch
      %16 = sbr.rel (0) target = $region9
    $region8: #{attention_forward.1} parent=1 // pred_region
      _
    $region9: #{attention_forward.1} parent=1 // pred_fallthru
      _
    // Predicated region
    $region10: #{attention_forward.1} parent=1 // pred_check
      _
    $region11: #{attention_forward.1} parent=1 // pred_check_branch
      %18 = sbr.rel (0) target = $region13
    $region12: #{attention_forward.1} parent=1 // pred_region
      _
    $region13: #{attention_forward.1} parent=1 // pred_fallthru
      _
    // Predicated region
    $region14: #{attention_forward.1} parent=1 // pred_check
      _
    $region15: #{attention_forward.1} parent=1 // pred_check_branch
      %20 = sbr.rel (0) target = $region17
    $region16: #{attention_forward.1} parent=1 // pred_region
      _
    $region17: #{attention_forward.1} parent=1 // pred_fallthru
      _
    // Predicated region
    $region18: #{attention_forward.1} parent=1 // pred_check
      _
    $region19: #{attention_forward.1} parent=1 // pred_check_branch
      %22 = sbr.rel (0) target = $region21
    $region20: #{attention_forward.1} parent=1 // pred_region
      _
    $region21: #{attention_forward.1} parent=1 // pred_fallthru
      _
    %v23 = vld [vmem:[%s0] sm:$0xff]
    %v24 = vld [vmem:[%s0 + $0x8] sm:$0xff]
    %v25 = vld [vmem:[%s1] sm:$0x3]
    %v26 = vld [vmem:[%s2] sm:$0x1]
    %v27 = vld [vmem:[%s3] sm:$0x1]
    %v29 = vlaneseq
    %v30 = vshrl.u32 %v29, 7
    %v31 = vsub.s32 0, %v30
    %v32 = vrot.slane %v26, %v31
    %v34 = vmul.f32 %v23, %v32
    %v35 = vmul.f32 %v24, %v32
    %vm36 = vcmask 261120
    %v37 = vsel %vm36, %v34, 0.0
    %38 = vadd.xlane.f32.xlu0 %v37
    %v39 = vpop.xlane.xlu0 %38
    %v40 = vsel %vm36, %v35, 0.0
    %41 = vadd.xlane.f32.xlu0 %v40
    %v42 = vpop.xlane.xlu0 %41
    %v44 = vlaneseq
    %v45 = vshrl.u32 %v44, 7
    %v46 = vsub.s32 0, %v45
    %v47 = vrot.slane %v27, %v46
    %v49 = vmul.f32 %v25, %v47
    %vm50 = vcmask 254976
    %v51 = vsel %vm50, %v49, 0.0
    %52 = vadd.xlane.f32.xlu0 %v51
    %v53 = vpop.xlane.xlu0 %52
    %v55 = vlaneseq
    %v56 = vshrl.u32 %v55, 7
    %v57 = vsub.s32 0, %v56
    %v58 = vrot.slane %v53, %v57
    %v59 = vlaneseq
    %v60 = vshrl.u32 %v59, 7
    %v61 = vsub.s32 1, %v60
    %v62 = vrot.slane %v53, %v61
    %v65 = vadd.f32 %v39, %v58
    %v66 = vadd.f32 %v42, %v62
    %v67 = vld [vmem:[#allocation2] sm:$0x1]
    %v69 = vlaneseq
    %v70 = vshrl.u32 %v69, 7
    %v71 = vsub.s32 0, %v70
    %v72 = vrot.slane %v67, %v71
    %73 = vset.pattern.permute.xlu0 0
    %74 = vperm.xlu0 %73, %v72
    %v75 = vpop.permute.xlu0 %74
    %v77 = vadd.f32 %v65, %v75
    %v78 = vadd.f32 %v66, %v75
    %81 = vset.pattern.permute.xlu0 0
    %82 = vperm.xlu0 %81, %v77
    %v83 = vpop.permute.xlu0 %82
    %84 = vset.pattern.permute.xlu0 0
    %85 = vperm.xlu0 %84, %v78
    %v86 = vpop.permute.xlu0 %85
    %v87 = vlaneseq
    %v88 = vand.u32 %v87, 127
    %v89 = vlaneseq
    %v90 = vshrl.u32 %v89, 7
    %v91 = vsub.s32 %v88, %v90
    %v92 = vrot.slane %v83, %v91
    %v93 = vlaneseq
    %v94 = vshrl.u32 %v93, 7
    %v95 = vsub.s32 %v88, %v94
    %v96 = vrot.slane %v86, %v95
    %vm97 = vcmask 1041409
    %v98 = vsel %vm97, %v96, %v92
    %vm100 = vcmask 58368
    %v101 = vsel %vm100, %v98, -inf
    %102 = vmax.xlane.f32.xlu0 %v101
    %v103 = vpop.xlane.xlu0 %102
    %v105 = vlaneseq
    %v106 = vshrl.u32 %v105, 7
    %v107 = vsub.s32 0, %v106
    %v108 = vrot.slane %v103, %v107
    %v109 = vlaneseq
    %v110 = vshrl.u32 %v109, 7
    %v111 = vsub.s32 1, %v110
    %v112 = vrot.slane %v103, %v111
    %v115 = vsub.f32 %v77, %v108
    %v116 = vsub.f32 %v78, %v112
    %v117 = vmul.f32 %v115, 1.442695
    %v118 = vpow.pop %v117
    %v119 = vmul.f32 %v116, 1.442695
    %v120 = vpow.pop %v119
    %123 = vset.pattern.permute.xlu0 0
    %124 = vperm.xlu0 %123, %v118
    %v125 = vpop.permute.xlu0 %124
    %126 = vset.pattern.permute.xlu0 0
    %127 = vperm.xlu0 %126, %v120
    %v128 = vpop.permute.xlu0 %127
    %v129 = vlaneseq
    %v130 = vshrl.u32 %v129, 7
    %v131 = vsub.s32 %v88, %v130
    %v132 = vrot.slane %v125, %v131
    %v133 = vlaneseq
    %v134 = vshrl.u32 %v133, 7
    %v135 = vsub.s32 %v88, %v134
    %v136 = vrot.slane %v128, %v135
    %v137 = vsel %vm97, %v136, %v132
    %v139 = vsel %vm100, %v137, 0.0
    %140 = vadd.xlane.f32.xlu0 %v139
    %v141 = vpop.xlane.xlu0 %140
    %v142 = vrcp.pop %v141
    %v143 = vmul.f32 %v141, %v142
    %v144 = vsub.f32 2.0, %v143
    %v145 = vmul.f32 %v142, %v144
    %v147 = vlaneseq
    %v148 = vshrl.u32 %v147, 7
    %v149 = vsub.s32 0, %v148
    %v150 = vrot.slane %v145, %v149
    %v151 = vlaneseq
    %v152 = vshrl.u32 %v151, 7
    %v153 = vsub.s32 1, %v152
    %v154 = vrot.slane %v145, %v153
    %v157 = vmul.f32 %v118, %v150
    %v158 = vmul.f32 %v120, %v154
    %160 = vset.pattern.permute.xlu0 0
    %161 = vperm.xlu0 %160, %v157
    %v162 = vpop.permute.xlu0 %161
    %165 = vset.pattern.permute.xlu0 0
    %166 = vperm.xlu0 %165, %v158
    %v167 = vpop.permute.xlu0 %166
    %v169 = vmul.f32 %v162, %v23
    %v170 = vmul.f32 %v167, %v24
    %v171 = vsel %vm36, %v169, 0.0
    %v172 = vrot.slane %v171, 4
    %v173 = vadd.f32 %v171, %v172
    %v174 = vrot.slane %v173, 2
    %v175 = vadd.f32 %v173, %v174
    %v176 = vrot.slane %v175, 1
    %v177 = vadd.f32 %v175, %v176
    %v178 = vsel %vm36, %v170, 0.0
    %v179 = vrot.slane %v178, 4
    %v180 = vadd.f32 %v178, %v179
    %v181 = vrot.slane %v180, 2
    %v182 = vadd.f32 %v180, %v181
    %v183 = vrot.slane %v182, 1
    %v184 = vadd.f32 %v182, %v183
    %v187 = vsel %vm97, %v184, %v177
    %189 = vst.msk [vmem:[#allocation3] sm:$0x3] %vm50, %v187
    // Predicated region
    $region22: #{attention_forward.1} parent=1 // pred_check
      _
    $region23: #{attention_forward.1} parent=1 // pred_check_branch
      %191 = sbr.rel (0) target = $region25
    $region24: #{attention_forward.1} parent=1 // pred_region
      %s193 = ssub.s32 32, 32
      %194 = vsyncadd [#allocation4], %s193
      %s196 = sshll.u32 [#allocation3], 4
      %s197 = int_to_ptr.vmem [resolvable:$true] %s196
      %199 = dma.vmem_to_hbm [thread:$0]  %s197, 32, %s5, [#allocation4]
    $region25: #{attention_forward.1} parent=1 // pred_fallthru
      _
    // Predicated region
    $region26: #{attention_forward.1} parent=1 // pred_check
      _
    $region27: #{attention_forward.1} parent=1 // pred_check_branch
      %201 = sbr.rel (0) target = $region29
    $region28: #{attention_forward.1} parent=1 // pred_region
      %202 = dma.done [#allocation4], 32
    $region29: #{attention_forward.1} parent=1 // pred_fallthru
      _
    %203 = vsyncpa [#allocation4], 1

</llo_original>
